<compile_context>
chip_gen: v7x
topology: tpu7x:2x2x1
jax: 0.10.0
libtpu: 0.0.40
codegen_flags: <defaults>
</compile_context>

<pallas_src>
import functools

import jax
import jax.numpy as jnp
from jax import lax
from jax.experimental import pallas as pl
from jax.experimental.pallas import tpu as pltpu


def get_padding(padding, kernel_size, dilation):
    if padding == "same":
        return ((kernel_size - 1) * dilation + 1) // 2
    elif padding == "causal":
        return (kernel_size - 1) * dilation
    elif padding == "valid":
        return 0
    raise ValueError("Padding should be 'valid', 'same' or 'causal'")


def _conv1d_kernel(x_ref, w_ref, b_ref, o_ref, xpad_ref, xcol_ref, *,
                   B, C_in, K, L, L_out, pad, stride, dilation, compute_dtype):
    # x_ref:   (B, C_in, L)           input in its natural (unpadded) layout
    # w_ref:   (C_out, K*C_in)        lane-dense 2-D weight, rows ordered (tap, ch)
    # b_ref:   (C_out, 1)             f32 bias
    # o_ref:   (C_out, B*L_out)       lane-dense output slab
    # xpad_ref:(B, C_in, L + 2*pad)   VMEM scratch: in-kernel zero padding
    # xcol_ref:(K*C_in, B*L_out)      VMEM scratch: im2col matrix

    # --- Stage 1: zero-padded copy of x in VMEM (replaces wrapper-side jnp.pad) ---
    if pad > 0:
        xpad_ref[...] = jnp.zeros_like(xpad_ref)
    for b in range(B):
        xpad_ref[b, :, pad:pad + L] = x_ref[b]
    xpad = xpad_ref[...]  # (B, C_in, L_pad)

    # --- Stage 2: im2col — (tap, channel) -> sublanes, (batch, time) -> lanes ---
    span = (L_out - 1) * stride + 1
    for k in range(K):  # K, B are small static ints -> unrolled at trace time
        start = k * dilation
        for b in range(B):
            # TODO(synk): for stride > 1 this strided lane slice costs XLU work;
            # a one-time deinterleaving reshape would be cheaper for large K.
            xcol_ref[k * C_in:(k + 1) * C_in, b * L_out:(b + 1) * L_out] = (
                xpad[b, :, start:start + span:stride])

    # --- Stage 3: one MXU matmul over the fused K*C_in contraction, plus bias ---
    lhs = w_ref[...]
    rhs = xcol_ref[...]
    if compute_dtype is not None:  # e.g. bf16 MXU feed on v6e/v7x for big shapes
        lhs = lhs.astype(compute_dtype)
        rhs = rhs.astype(compute_dtype)
    acc = jnp.dot(lhs, rhs, preferred_element_type=jnp.float32)  # (C_out, B*L_out)
    o_ref[...] = (acc + b_ref[...]).astype(o_ref.dtype)


def conv1d_pallas(x, weight, bias, *, stride=1, padding="same", dilation=1,
                  compute_dtype=None):
    """x: (B, C_in, L); weight: (C_out, C_in, K); bias: (C_out,) or None.

    Returns (B, C_out, L_out) with L_out = min(conv_len, L), matching the
    PyTorch module's `self.layer(x)[..., :length]`.
    """
    B, C_in, L = x.shape
    C_out, _, K = weight.shape
    pad = get_padding(padding, K, dilation)
    L_pad = L + 2 * pad

    # PyTorch conv output length, then crop to the input length.
    L_conv = (L_pad - dilation * (K - 1) - 1) // stride + 1
    L_out = min(L_conv, L)

    # Free layout plumbing: 2-D lane-dense weight; row index = k*C_in + c so it
    # matches the im2col row order built inside the kernel.
    w2 = jnp.transpose(weight, (0, 2, 1)).reshape(C_out, K * C_in)
    if bias is None:
        b2 = jnp.zeros((C_out, 1), jnp.float32)
    else:
        b2 = bias.reshape(C_out, 1).astype(jnp.float32)

    kernel = functools.partial(
        _conv1d_kernel, B=B, C_in=C_in, K=K, L=L, L_out=L_out, pad=pad,
        stride=stride, dilation=dilation, compute_dtype=compute_dtype)

    out2d = pl.pallas_call(
        kernel,
        out_shape=jax.ShapeDtypeStruct((C_out, B * L_out), x.dtype),
        grid=(1,),  # whole (tiny) problem in one step; no per-step overhead
        in_specs=[
            pl.BlockSpec((B, C_in, L), lambda i: (0, 0, 0)),
            pl.BlockSpec((C_out, K * C_in), lambda i: (0, 0)),
            pl.BlockSpec((C_out, 1), lambda i: (0, 0)),
        ],
        out_specs=pl.BlockSpec((C_out, B * L_out), lambda i: (0, 0)),
        scratch_shapes=[
            pltpu.VMEM((B, C_in, L_pad), x.dtype),       # padded x
            pltpu.VMEM((K * C_in, B * L_out), x.dtype),  # im2col slab
        ],
        compiler_params=pltpu.CompilerParams(
            dimension_semantics=("arbitrary",)),
    )(x, w2, b2)

    # Layout plumbing back to the PyTorch (B, C_out, L_out) convention.
    return jnp.transpose(out2d.reshape(C_out, B, L_out), (1, 0, 2))


def conv1d_reference(x, weight, bias, *, stride=1, padding="same", dilation=1):
    B, C_in, L = x.shape
    K = weight.shape[-1]
    p = get_padding(padding, K, dilation)
    y = lax.conv_general_dilated(
        x, weight,
        window_strides=(stride,),
        padding=[(p, p)],
        rhs_dilation=(dilation,),
        dimension_numbers=("NCH", "OIH", "NCH"),
    )
    if bias is not None:
        y = y + bias.reshape(1, -1, 1)
    return y[..., :L]


if __name__ == "__main__":
    # Module config: Conv1d(input_size=4, output_size=6, kernel_size=3,
    #                        stride=1, padding='same', dilation=1, bias=True)
    B, C_in, C_out, L, K = 2, 4, 6, 16, 3
    stride, dilation, padding = 1, 1, "same"

    key = jax.random.PRNGKey(0)
    kx, kw, kb = jax.random.split(key, 3)

    x = jax.random.normal(kx, (B, C_in, L), dtype=jnp.float32)

    # Deterministic init mimicking PyTorch Conv1d default: U(-bound, bound),
    # bound = 1/sqrt(C_in * K).
    bound = 1.0 / (C_in * K) ** 0.5
    weight = jax.random.uniform(kw, (C_out, C_in, K), jnp.float32, -bound, bound)
    bias = jax.random.uniform(kb, (C_out,), jnp.float32, -bound, bound)

    out = conv1d_pallas(x, weight, bias, stride=stride, padding=padding,
                        dilation=dilation)
    out = jax.block_until_ready(out)

    ref = conv1d_reference(x, weight, bias, stride=stride, padding=padding,
                           dilation=dilation)
    assert out.shape == ref.shape, (out.shape, ref.shape)
    assert jnp.allclose(out, ref, atol=1e-5, rtol=1e-5)

    print("KERNEL_OK")
</pallas_src>

<mosaic_0001>
module attributes {stable_mosaic.version = 11 : i64} {
  func.func @_conv1d_kernel(%arg0: i32, %arg1: memref<2x4x16xf32, #tpu.memory_space<vmem>>, %arg2: memref<6x12xf32, #tpu.memory_space<vmem>>, %arg3: memref<6x1xf32, #tpu.memory_space<vmem>>, %arg4: memref<6x32xf32, #tpu.memory_space<vmem>>, %arg5: memref<2x4x18xf32, #tpu.memory_space<vmem>>, %arg6: memref<12x32xf32, #tpu.memory_space<vmem>>) attributes {dimension_semantics = [#tpu.dimension_semantics<arbitrary>], iteration_bounds = array<i64: 1>, scalar_prefetch = 0 : i64, scratch_operands = 2 : i64, tpu.core_type = #tpu.core_type<tc>, window_params = [{pipeline_mode = #tpu.pipeline_mode<synchronous>, transform_indices = @transform_0, window_bounds = array<i64: 2, 4, 16>}, {pipeline_mode = #tpu.pipeline_mode<synchronous>, transform_indices = @transform_1, window_bounds = array<i64: 6, 12>}, {pipeline_mode = #tpu.pipeline_mode<synchronous>, transform_indices = @transform_2, window_bounds = array<i64: 6, 1>}, {pipeline_mode = #tpu.pipeline_mode<synchronous>, transform_indices = @transform_3, window_bounds = array<i64: 6, 32>}]} {
    %cst = arith.constant 0.000000e+00 : f32
    %0 = vector.broadcast %cst : f32 to vector<2x4x18xf32>
    %c0 = arith.constant 0 : index
    %c0_0 = arith.constant 0 : index
    %c0_1 = arith.constant 0 : index
    %1 = vector.load %arg5[%c0, %c0_0, %c0_1] : memref<2x4x18xf32, #tpu.memory_space<vmem>>, vector<2x4x18xf32>
    tpu.vector_store %arg5[%c0, %c0_0, %c0_1], %0 {strides = array<i32>} : memref<2x4x18xf32, #tpu.memory_space<vmem>>, vector<2x4x18xf32>,
    %c0_2 = arith.constant 0 : index
    %c0_3 = arith.constant 0 : index
    %c0_4 = arith.constant 0 : index
    %2 = vector.load %arg1[%c0_2, %c0_3, %c0_4] : memref<2x4x16xf32, #tpu.memory_space<vmem>>, vector<1x4x16xf32>
    %3 = vector.shape_cast %2 : vector<1x4x16xf32> to vector<4x16xf32>
    %c0_5 = arith.constant 0 : index
    %c0_6 = arith.constant 0 : index
    %c1 = arith.constant 1 : index
    %4 = vector.load %arg5[%c0_5, %c0_6, %c1] : memref<2x4x18xf32, #tpu.memory_space<vmem>>, vector<1x4x16xf32>
    %5 = vector.shape_cast %4 : vector<1x4x16xf32> to vector<4x16xf32>
    %6 = vector.shape_cast %3 : vector<4x16xf32> to vector<1x4x16xf32>
    tpu.vector_store %arg5[%c0_5, %c0_6, %c1], %6 {strides = array<i32>} : memref<2x4x18xf32, #tpu.memory_space<vmem>>, vector<1x4x16xf32>,
    %c1_7 = arith.constant 1 : index
    %c0_8 = arith.constant 0 : index
    %c0_9 = arith.constant 0 : index
    %7 = vector.load %arg1[%c1_7, %c0_8, %c0_9] : memref<2x4x16xf32, #tpu.memory_space<vmem>>, vector<1x4x16xf32>
    %8 = vector.shape_cast %7 : vector<1x4x16xf32> to vector<4x16xf32>
    %c1_10 = arith.constant 1 : index
    %c0_11 = arith.constant 0 : index
    %c1_12 = arith.constant 1 : index
    %9 = vector.load %arg5[%c1_10, %c0_11, %c1_12] : memref<2x4x18xf32, #tpu.memory_space<vmem>>, vector<1x4x16xf32>
    %10 = vector.shape_cast %9 : vector<1x4x16xf32> to vector<4x16xf32>
    %11 = vector.shape_cast %8 : vector<4x16xf32> to vector<1x4x16xf32>
    tpu.vector_store %arg5[%c1_10, %c0_11, %c1_12], %11 {strides = array<i32>} : memref<2x4x18xf32, #tpu.memory_space<vmem>>, vector<1x4x16xf32>,
    %c0_13 = arith.constant 0 : index
    %c0_14 = arith.constant 0 : index
    %c0_15 = arith.constant 0 : index
    %12 = vector.load %arg5[%c0_13, %c0_14, %c0_15] : memref<2x4x18xf32, #tpu.memory_space<vmem>>, vector<2x4x18xf32>
    %13 = vector.extract_strided_slice %12 {offsets = [0, 0, 0], sizes = [1, 4, 16], strides = [1, 1, 1]} : vector<2x4x18xf32> to vector<1x4x16xf32>
    %14 = vector.shape_cast %13 : vector<1x4x16xf32> to vector<4x16xf32>
    %c0_16 = arith.constant 0 : index
    %c0_17 = arith.constant 0 : index
    %15 = vector.load %arg6[%c0_16, %c0_17] : memref<12x32xf32, #tpu.memory_space<vmem>>, vector<4x16xf32>
    tpu.vector_store %arg6[%c0_16, %c0_17], %14 {strides = array<i32>} : memref<12x32xf32, #tpu.memory_space<vmem>>, vector<4x16xf32>,
    %16 = vector.extract_strided_slice %12 {offsets = [1, 0, 0], sizes = [1, 4, 16], strides = [1, 1, 1]} : vector<2x4x18xf32> to vector<1x4x16xf32>
    %17 = vector.shape_cast %16 : vector<1x4x16xf32> to vector<4x16xf32>
    %c0_18 = arith.constant 0 : index
    %c16 = arith.constant 16 : index
    %18 = vector.load %arg6[%c0_18, %c16] : memref<12x32xf32, #tpu.memory_space<vmem>>, vector<4x16xf32>
    tpu.vector_store %arg6[%c0_18, %c16], %17 {strides = array<i32>} : memref<12x32xf32, #tpu.memory_space<vmem>>, vector<4x16xf32>,
    %19 = vector.extract_strided_slice %12 {offsets = [0, 0, 1], sizes = [1, 4, 16], strides = [1, 1, 1]} : vector<2x4x18xf32> to vector<1x4x16xf32>
    %20 = vector.shape_cast %19 : vector<1x4x16xf32> to vector<4x16xf32>
    %c4 = arith.constant 4 : index
    %c0_19 = arith.constant 0 : index
    %21 = vector.load %arg6[%c4, %c0_19] : memref<12x32xf32, #tpu.memory_space<vmem>>, vector<4x16xf32>
    tpu.vector_store %arg6[%c4, %c0_19], %20 {strides = array<i32>} : memref<12x32xf32, #tpu.memory_space<vmem>>, vector<4x16xf32>,
    %22 = vector.extract_strided_slice %12 {offsets = [1, 0, 1], sizes = [1, 4, 16], strides = [1, 1, 1]} : vector<2x4x18xf32> to vector<1x4x16xf32>
    %23 = vector.shape_cast %22 : vector<1x4x16xf32> to vector<4x16xf32>
    %c4_20 = arith.constant 4 : index
    %c16_21 = arith.constant 16 : index
    %24 = vector.load %arg6[%c4_20, %c16_21] : memref<12x32xf32, #tpu.memory_space<vmem>>, vector<4x16xf32>
    tpu.vector_store %arg6[%c4_20, %c16_21], %23 {strides = array<i32>} : memref<12x32xf32, #tpu.memory_space<vmem>>, vector<4x16xf32>,
    %25 = vector.extract_strided_slice %12 {offsets = [0, 0, 2], sizes = [1, 4, 16], strides = [1, 1, 1]} : vector<2x4x18xf32> to vector<1x4x16xf32>
    %26 = vector.shape_cast %25 : vector<1x4x16xf32> to vector<4x16xf32>
    %c8 = arith.constant 8 : index
    %c0_22 = arith.constant 0 : index
    %27 = vector.load %arg6[%c8, %c0_22] : memref<12x32xf32, #tpu.memory_space<vmem>>, vector<4x16xf32>
    tpu.vector_store %arg6[%c8, %c0_22], %26 {strides = array<i32>} : memref<12x32xf32, #tpu.memory_space<vmem>>, vector<4x16xf32>,
    %28 = vector.extract_strided_slice %12 {offsets = [1, 0, 2], sizes = [1, 4, 16], strides = [1, 1, 1]} : vector<2x4x18xf32> to vector<1x4x16xf32>
    %29 = vector.shape_cast %28 : vector<1x4x16xf32> to vector<4x16xf32>
    %c8_23 = arith.constant 8 : index
    %c16_24 = arith.constant 16 : index
    %30 = vector.load %arg6[%c8_23, %c16_24] : memref<12x32xf32, #tpu.memory_space<vmem>>, vector<4x16xf32>
    tpu.vector_store %arg6[%c8_23, %c16_24], %29 {strides = array<i32>} : memref<12x32xf32, #tpu.memory_space<vmem>>, vector<4x16xf32>,
    %c0_25 = arith.constant 0 : index
    %c0_26 = arith.constant 0 : index
    %31 = vector.load %arg2[%c0_25, %c0_26] : memref<6x12xf32, #tpu.memory_space<vmem>>, vector<6x12xf32>
    %c0_27 = arith.constant 0 : index
    %c0_28 = arith.constant 0 : index
    %32 = vector.load %arg6[%c0_27, %c0_28] : memref<12x32xf32, #tpu.memory_space<vmem>>, vector<12x32xf32>
    %cst_29 = arith.constant dense<0.000000e+00> : vector<6x32xf32>
    %33 = tpu.matmul %31, %32, %cst_29 {dimension_numbers = #tpu.dot_dimension_numbers<[1], [0], [0], [1], [0, 0, 1, 1], [], []>} : vector<6x12xf32>, vector<12x32xf32>, vector<6x32xf32> -> vector<6x32xf32>
    %c0_30 = arith.constant 0 : index
    %c0_31 = arith.constant 0 : index
    %34 = vector.load %arg3[%c0_30, %c0_31] : memref<6x1xf32, #tpu.memory_space<vmem>>, vector<6x1xf32>
    %35 = vector.broadcast %34 : vector<6x1xf32> to vector<6x32xf32>
    %36 = arith.addf %33, %35 : vector<6x32xf32>
    %c0_32 = arith.constant 0 : index
    %c0_33 = arith.constant 0 : index
    %37 = vector.load %arg4[%c0_32, %c0_33] : memref<6x32xf32, #tpu.memory_space<vmem>>, vector<6x32xf32>
    tpu.vector_store %arg4[%c0_32, %c0_33], %36 {strides = array<i32>} : memref<6x32xf32, #tpu.memory_space<vmem>>, vector<6x32xf32>,
    return
  }
  func.func @transform_0(%arg0: i32) -> (i32, i32, i32) {
    %c0_i32 = arith.constant 0 : i32
    %c0_i32_0 = arith.constant 0 : i32
    %c0_i32_1 = arith.constant 0 : i32
    %c0_i32_2 = arith.constant 0 : i32
    return %c0_i32, %c0_i32_0, %c0_i32_1 : i32, i32, i32
  }
  func.func @transform_1(%arg0: i32) -> (i32, i32) {
    %c0_i32 = arith.constant 0 : i32
    %c0_i32_0 = arith.constant 0 : i32
    %c0_i32_1 = arith.constant 0 : i32
    return %c0_i32, %c0_i32_0 : i32, i32
  }
  func.func @transform_2(%arg0: i32) -> (i32, i32) {
    %c0_i32 = arith.constant 0 : i32
    %c0_i32_0 = arith.constant 0 : i32
    %c0_i32_1 = arith.constant 0 : i32
    return %c0_i32, %c0_i32_0 : i32, i32
  }
  func.func @transform_3(%arg0: i32) -> (i32, i32) {
    %c0_i32 = arith.constant 0 : i32
    %c0_i32_0 = arith.constant 0 : i32
    %c0_i32_1 = arith.constant 0 : i32
    return %c0_i32, %c0_i32_0 : i32, i32
  }
}

</mosaic_0001>

<llo_original>
// kernel: tpu_custom_call.1
$region0: #{tpu_custom_call.1}
  #allocation0 [shape = 'u32[]', space=smem, size = 0x4, offset = 0x4, fixed_abs, tag = 'smem constant byte address 0x4 - core index']
  #allocation1 [shape = 'u32[144,128]{1,0:T(1,128)}', space=vmem, size = 0x12000, scoped, tag = 'internal scratch']
  #allocation2 [shape = 'f32[2,4,18]{2,1,0:T(4,128)}', space=vmem, size = 0x1000, scoped, tag = 'scratch operand']
  #allocation3 [shape = 'f32[12,32]{1,0:T(8,128)}', space=vmem, size = 0x2000, scoped, tag = 'scratch operand']
  %s0 = inlined_call_operand.vmem [shape: f32[2,4,16], index: 0, kind: input, shape index: {}]
  %s1 = inlined_call_operand.hbm [shape: f32[6,12], index: 1, kind: input, shape index: {}]
  %s2 = inlined_call_operand.vmem [shape: f32[6,1], index: 2, kind: input, shape index: {}]
  %s3 = inlined_call_operand.hbm [shape: f32[6,32], index: 3, kind: output, shape index: {}]
  %s4 = sld [smem:[#allocation0]]
  $region26: #{tpu_custom_call.1} parent=0
    _
  %s6 = ssub.s32 1, %s4
  %s7 = scalar_select 0, %s6, %s4
  $region1: #{tpu_custom_call.1} parent=0
    #allocation4 [shape = 'u8[4096]{0}', space=vmem, size = 0x1000, scoped, tag = 'input window, operand 1, single buffered']
    #allocation5 [shape = 's32[1]{0}', space=sflag, size = 0x4, scoped, tag = 'scoped memory for tpu_custom_call.1']
    #allocation6 [shape = 's32[1]{0}', space=sflag, size = 0x4, scoped, tag = 'scoped memory for tpu_custom_call.1']
    #allocation7 [shape = 'u8[4096]{0}', space=vmem, size = 0x1000, scoped, tag = 'output window, operand 0, single buffered']
    %8 = vsyncpa [#allocation5], 0
    %9 = vsyncpa [#allocation6], 0
    // Predicated region
    $region2: #{tpu_custom_call.1} parent=1 // pred_check
      _
    $region3: #{tpu_custom_call.1} parent=1 // pred_check_branch
      %11 = sbr.rel (0) target = $region5
    $region4: #{tpu_custom_call.1} parent=1 // pred_region
      _
    $region5: #{tpu_custom_call.1} parent=1 // pred_fallthru
      _
    // Predicated region
    $region6: #{tpu_custom_call.1} parent=1 // pred_check
      _
    $region7: #{tpu_custom_call.1} parent=1 // pred_check_branch
      %13 = sbr.rel (0) target = $region9
    $region8: #{tpu_custom_call.1} parent=1 // pred_region
      %s15 = ssub.s32 128, 128
      %16 = vsyncadd [#allocation5], %s15
      %s18 = sshll.u32 [#allocation4], 4
      %s19 = int_to_ptr.vmem [resolvable:$true] %s18
      %21 = dma.hbm_to_vmem [thread:$0]  %s1, 128, %s19, [#allocation5]
    $region9: #{tpu_custom_call.1} parent=1 // pred_fallthru
      _
    // Predicated region
    $region10: #{tpu_custom_call.1} parent=1 // pred_check
      _
    $region11: #{tpu_custom_call.1} parent=1 // pred_check_branch
      %23 = sbr.rel (0) target = $region13
    $region12: #{tpu_custom_call.1} parent=1 // pred_region
      _
    $region13: #{tpu_custom_call.1} parent=1 // pred_fallthru
      _
    // Predicated region
    $region14: #{tpu_custom_call.1} parent=1 // pred_check
      _
    $region15: #{tpu_custom_call.1} parent=1 // pred_check_branch
      %25 = sbr.rel (0) target = $region17
    $region16: #{tpu_custom_call.1} parent=1 // pred_region
      %26 = dma.done [#allocation5], 128
    $region17: #{tpu_custom_call.1} parent=1 // pred_fallthru
      _
    %vm27 = vcmask 142336
    %28 = vst.msk [vmem:[#allocation2] sm:$0xf] %vm27, 0.0
    %29 = vst.msk [vmem:[#allocation2 + $0x4] sm:$0xf] %vm27, 0.0
    %v30 = vld [vmem:[%s0] sm:$0xf]
    %32 = vrot.lane.b32.xlu0 %v30, 1
    %v33 = vpop.permute.xlu0 %32
    %vm35 = vcmask 134152
    %36 = vst.msk [vmem:[#allocation2] sm:$0xf] %vm35, %v33
    %s37 = scalar_lea.vmem %s0, 4
    %v38 = vld [vmem:[%s37] sm:$0xf]
    %40 = vrot.lane.b32.xlu0 %v38, 1
    %v41 = vpop.permute.xlu0 %40
    %s43 = scalar_lea.vmem [#allocation2], 4
    %44 = vst.msk [vmem:[%s43] sm:$0xf] %vm35, %v41
    %v45 = vld [vmem:[#allocation2] sm:$0xf]
    %v46 = vld [vmem:[#allocation2 + $0x4] sm:$0xf]
    %vm47 = vcmask 125952
    %48 = vst.msk [vmem:[#allocation3] sm:$0xf] %vm47, %v45
    %50 = vrot.lane.b32.xlu0 %v46, 16
    %v51 = vpop.permute.xlu0 %50
    %vm53 = vcmask 257152
    %54 = vst.msk [vmem:[#allocation3] sm:$0xf] %vm53, %v51
    %56 = vrot.lane.b32.xlu0 %v45, 127
    %v57 = vpop.permute.xlu0 %56
    %59 = vst.msk [vmem:[#allocation3 + $0x4] sm:$0xf] %vm47, %v57
    %60 = vrot.lane.b32.xlu0 %v46, 15
    %v61 = vpop.permute.xlu0 %60
    %63 = vst.msk [vmem:[#allocation3 + $0x4] sm:$0xf] %vm53, %v61
    %64 = vrot.lane.b32.xlu0 %v45, 126
    %v65 = vpop.permute.xlu0 %64
    %67 = vst.msk [vmem:[#allocation3 + $0x8] sm:$0xf] %vm47, %v65
    %68 = vrot.lane.b32.xlu0 %v46, 14
    %v69 = vpop.permute.xlu0 %68
    %71 = vst.msk [vmem:[#allocation3 + $0x8] sm:$0xf] %vm53, %v69
    %v72 = vld [vmem:[#allocation4] sm:$0x3f]
    %v73 = vld [vmem:[#allocation3] sm:$0xff]
    %v74 = vld [vmem:[#allocation3 + $0x8] sm:$0xf]
    %v75 = vld [vmem:[%s2] sm:$0x3f]
    %77 = vset.pattern.permute.xlu0 0
    %78 = vperm.xlu0 %77, %v75
    %v79 = vpop.permute.xlu0 %78
    %vm81 = vcmask 97280
    %v83 = vsel %vm81, %v72, 0
    %vm85 = vcmask 1043456
    %v87 = vsel %vm85, %v74, 0
    %89 = vmatprep.subr.mxu0 0.0
    %90 = vmatpush1.msra.mxu0 %v73
    %91 = vmatprep.subr.mxu0 0.0
    %92 = vmatpush1.msra.mxu0 %v87
    %93 = vmatprep.subr.mxu0 0.0
    %94 = vmatpush1.msra.mxu0 0.0
    %95 = vmatprep.subr.mxu0 0.0
    %96 = vmatpush1.msra.mxu0 0.0
    %97 = vmatprep.subr.mxu0 0.0
    %98 = vmatpush1.msra.mxu0 0.0
    %99 = vmatprep.subr.mxu0 0.0
    %100 = vmatpush1.msra.mxu0 0.0
    %101 = vmatprep.subr.mxu0 0.0
    %102 = vmatpush1.msra.mxu0 0.0
    %103 = vmatprep.subr.mxu0 0.0
    %104 = vmatpush1.msra.mxu0 0.0
    %105 = vmatprep.subr.mxu0 0.0
    %106 = vmatpush1.msra.mxu0 0.0
    %107 = vmatprep.subr.mxu0 0.0
    %108 = vmatpush1.msra.mxu0 0.0
    %109 = vmatprep.subr.mxu0 0.0
    %110 = vmatpush1.msra.mxu0 0.0
    %111 = vmatprep.subr.mxu0 0.0
    %112 = vmatpush1.msra.mxu0 0.0
    %113 = vmatprep.subr.mxu0 0.0
    %114 = vmatpush1.msra.mxu0 0.0
    %115 = vmatprep.subr.mxu0 0.0
    %116 = vmatpush1.msra.mxu0 0.0
    %117 = vmatprep.subr.mxu0 0.0
    %118 = vmatpush1.msra.mxu0 0.0
    %119 = vmatprep.subr.mxu0 0.0
    %120 = vmatpush1.msra.mxu0 0.0
    %121 = vmatprep.subr.mxu0 0.0
    %122 = vmatpush1.msra.mxu0 0.0
    %123 = vmatprep.subr.mxu0 0.0
    %124 = vmatpush1.msra.mxu0 0.0
    %125 = vmatprep.subr.mxu0 0.0
    %126 = vmatpush1.msra.mxu0 0.0
    %127 = vmatprep.subr.mxu0 0.0
    %128 = vmatpush1.msra.mxu0 0.0
    %129 = vmatprep.subr.mxu0 0.0
    %130 = vmatpush1.msra.mxu0 0.0
    %131 = vmatprep.subr.mxu0 0.0
    %132 = vmatpush1.msra.mxu0 0.0
    %133 = vmatprep.subr.mxu0 0.0
    %134 = vmatpush1.msra.mxu0 0.0
    %135 = vmatprep.subr.mxu0 0.0
    %136 = vmatpush1.msra.mxu0 0.0
    %137 = vmatprep.subr.mxu0 0.0
    %138 = vmatpush1.msra.mxu0 0.0
    %139 = vmatprep.subr.mxu0 0.0
    %140 = vmatpush1.msra.mxu0 0.0
    %141 = vmatprep.subr.mxu0 0.0
    %142 = vmatpush1.msra.mxu0 0.0
    %143 = vmatprep.subr.mxu0 0.0
    %144 = vmatpush1.msra.mxu0 0.0
    %145 = vmatprep.subr.mxu0 0.0
    %146 = vmatpush1.msra.mxu0 0.0
    %147 = vmatprep.subr.mxu0 0.0
    %148 = vmatpush1.msra.mxu0 0.0
    %149 = vmatprep.subr.mxu0 0.0
    %150 = vmatpush1.msra.mxu0 0.0
    %151 = vmatprep.subr.mxu0 0.0
    %152 = vmatpush1.msra.mxu0 0.0
    %153 = vmatprep.mubr.f32.mxu0 0.0
    %154 = vmatmul.mubr.f32.gmra.mrb[0].mxu0 %v83
    %v155 = vpop.f32.mrb[0].mxu0
    %v156 = vadd.f32 %v79, %v155
    %v157 = vpop.f32.mrb[0].mxu0
    %158 = vdwg.mxu0
    %vm159 = vcmask 259072
    %160 = vst.msk [vmem:[#allocation7] sm:$0x3f] %vm159, %v156
    // Predicated region
    $region18: #{tpu_custom_call.1} parent=1 // pred_check
      _
    $region19: #{tpu_custom_call.1} parent=1 // pred_check_branch
      %162 = sbr.rel (0) target = $region21
    $region20: #{tpu_custom_call.1} parent=1 // pred_region
      %s164 = ssub.s32 128, 128
      %165 = vsyncadd [#allocation6], %s164
      %s167 = sshll.u32 [#allocation7], 4
      %s168 = int_to_ptr.vmem [resolvable:$true] %s167
      %170 = dma.vmem_to_hbm [thread:$0]  %s168, 128, %s3, [#allocation6]
    $region21: #{tpu_custom_call.1} parent=1 // pred_fallthru
      _
    // Predicated region
    $region22: #{tpu_custom_call.1} parent=1 // pred_check
      _
    $region23: #{tpu_custom_call.1} parent=1 // pred_check_branch
      %172 = sbr.rel (0) target = $region25
    $region24: #{tpu_custom_call.1} parent=1 // pred_region
      %173 = dma.done [#allocation6], 128
    $region25: #{tpu_custom_call.1} parent=1 // pred_fallthru
      _
    %174 = vsyncpa [#allocation5], 1
    %175 = vsyncpa [#allocation6], 1

</llo_original>
